<compile_context>
chip_gen: v7x
topology: tpu7x:2x2x1
jax: 0.10.0
libtpu: 0.0.40
codegen_flags: <defaults>
</compile_context>

<pallas_src>
import jax
import jax.numpy as jnp
from jax.experimental import pallas as pl
from jax.experimental.pallas import tpu as pltpu


# ----------------------------------------------------------------------------- kernel
def embeddings_kernel(patches_ref, w_ref, add_ref, out_ref):
    # patches_ref: (bt*seq_pad, Kp) bf16 ; per batch: row 0 = zeros (cls slot),
    #              rows >= seq = zero padding.
    # w_ref:       (Kp, Hp) bf16   resident conv-as-matmul weight.
    # add_ref:     (seq, Hp) f32   row 0 = cls+pos[0]; row 1+p = pos[1+p]+conv_bias.
    # out_ref:     (bt, seq, Hp)   output slab.
    bt, seq, Hp = out_ref.shape
    seq_pad = patches_ref.shape[0] // bt
    # One large MXU matmul per slab (single RHS push, fill/drain amortized over
    # M = bt*seq_pad rows instead of seq per dot).
    proj = jnp.dot(patches_ref[...], w_ref[...], preferred_element_type=jnp.float32)
    proj = proj.reshape(bt, seq_pad, Hp)[:, :seq, :]          # drop seq padding rows
    out_ref[...] = (proj + add_ref[...][None]).astype(out_ref.dtype)


# ----------------------------------------------------------------------------- sizing helpers
def _round_up(x, m):
    return (x + m - 1) // m * m


def _tpu_generation():
    """Returns (tensorcores_per_chip, physical VMEM bytes per TensorCore)."""
    num_tc = 1
    vmem_phys = None
    kind = ""
    try:
        kind = jax.devices()[0].device_kind.lower()
    except Exception:
        pass
    try:
        info = pltpu.get_tpu_info()
        vmem_phys = int(getattr(info, "vmem_capacity_bytes", 0)) or None
    except Exception:
        pass
    if "v7" in kind:
        num_tc = 2
        vmem_phys = min(vmem_phys or (64 << 20), 64 << 20)     # 64 MiB per TC on v7x
    elif vmem_phys is None:
        vmem_phys = 128 << 20                                  # v5e / v6e
    return num_tc, vmem_phys


def _pick_batch_tile(B, seq, seq_pad, Kp, Hp, out_itemsize, num_tc, vmem_phys):
    """Batches per grid step.

    Explicit VMEM accounting (the old estimate ignored double-buffering and the
    resident blocks):
        2 * bt * (seq_pad*Kp bf16 patches + seq*Hp out)   # pipelined, double-buffered
      + 2 * (Kp*Hp bf16 weight + seq*Hp f32 add)          # resident (worst case x2)
    Targets ~12 MiB of per-step block data, stays within ~3/4 of physical VMEM,
    and on dual-TC chips keeps the grid length a multiple of num_tc.
    """
    per_batch = seq_pad * Kp * 2 + seq * Hp * out_itemsize
    resident = Kp * Hp * 2 + seq * Hp * 4
    budget = int(vmem_phys * 3 // 4) - 2 * resident - (4 << 20)   # headroom
    budget = max(budget, 2 * per_batch)
    target = 12 << 20
    bt = min(B, max(1, target // per_batch), max(1, budget // (2 * per_batch)))
    if num_tc > 1 and B >= num_tc:
        bt = min(bt, B // num_tc)          # >= num_tc grid steps for megacore sharding
    bt = max(bt, 1)
    # Require B % bt == 0 and (dual-TC only) an even split of grid steps across cores.
    while bt > 1 and (
        B % bt != 0
        or (num_tc > 1 and B >= num_tc and (B // bt) % num_tc != 0)
    ):
        bt -= 1
    return bt


def _resident_spec(shape):
    """Constant-index block: single-buffer it if this jax supports pipeline_mode."""
    index_map = lambda i: (0,) * len(shape)
    try:
        return pl.BlockSpec(shape, index_map, pipeline_mode=pl.Buffered(1))
    except Exception:
        return pl.BlockSpec(shape, index_map)


# ----------------------------------------------------------------------------- wrapper
def vit_embeddings(x_nchw, conv_w, conv_b, cls_token, pos_emb, *, out_dtype=jnp.float32):
    """
    x_nchw : (B, C, H, W)  float32
    conv_w : (hidden, C, P, P)   (torch Conv2d weight layout)
    conv_b : (hidden,)
    cls_token : (1, 1, hidden)
    pos_emb   : (1, NP+1, hidden)
    returns   : (B, NP+1, hidden) in out_dtype
                (out_dtype=jnp.bfloat16 halves the store HBM traffic on the
                 bandwidth-bound v6e/v7x path; f32 default for strict parity.)
    """
    B, C, Himg, Wimg = x_nchw.shape
    hidden, _, P, _ = conv_w.shape
    nph, npw = Himg // P, Wimg // P
    num_patches = nph * npw
    seq = num_patches + 1
    K = C * P * P

    Kp = _round_up(K, 128)        # lane-dense contraction dim (no masked MXU edge tiles)
    Hp = _round_up(hidden, 128)   # lane-dense output width (unmasked vst)
    seq_pad = _round_up(seq, 16)  # bf16 sublane multiple -> batch-merge reshape is a view

    out_itemsize = jnp.dtype(out_dtype).itemsize
    num_tc, vmem_phys = _tpu_generation()
    bt = _pick_batch_tile(B, seq, seq_pad, Kp, Hp, out_itemsize, num_tc, vmem_phys)

    # ---- layout glue (candidate for operand fusion into the pallas call) ----
    # (B,C,nph,P,npw,P) -> (B,nph,npw,C,P,P) -> (B,NP,K); one leading zero row per
    # batch (cls slot), seq padding to seq_pad, K padding to Kp, bf16 cast, then a
    # free row-major merge to (B*seq_pad, Kp).
    patches = x_nchw.reshape(B, C, nph, P, npw, P).transpose(0, 2, 4, 1, 3, 5)
    patches = patches.reshape(B, num_patches, K)
    patches = jnp.pad(patches, ((0, 0), (1, seq_pad - seq), (0, Kp - K)))
    patches = patches.astype(jnp.bfloat16).reshape(B * seq_pad, Kp)

    # Conv2d weight (hidden,C,P,P) -> (Kp, Hp) bf16
    w_mat = conv_w.reshape(hidden, K).T
    w_mat = jnp.pad(w_mat, ((0, Kp - K), (0, Hp - hidden))).astype(jnp.bfloat16)

    # Batch-invariant additive constant, folded once in the wrapper:
    #   row 0     : cls_token + pos[0]
    #   row 1 + p : pos[1+p] + conv_bias
    pos = pos_emb.reshape(seq, hidden).astype(jnp.float32)
    cls = cls_token.reshape(1, hidden).astype(jnp.float32)
    add_const = jnp.concatenate(
        [cls + pos[:1], pos[1:] + conv_b[None, :].astype(jnp.float32)], axis=0)
    add_const = jnp.pad(add_const, ((0, 0), (0, Hp - hidden)))

    grid = (B // bt,)
    grid_spec = pltpu.PrefetchScalarGridSpec(
        num_scalar_prefetch=0,
        grid=grid,
        in_specs=[
            pl.BlockSpec((bt * seq_pad, Kp), lambda i: (i, 0)),   # per-step patch slab
            _resident_spec((Kp, Hp)),                             # weight (resident)
            _resident_spec((seq, Hp)),                            # cls/pos/bias const
        ],
        out_specs=pl.BlockSpec((bt, seq, Hp), lambda i: (i, 0, 0)),
    )

    # Explicit, generation-aware VMEM limit consistent with the tiling math above.
    per_batch = seq_pad * Kp * 2 + seq * Hp * out_itemsize
    resident = Kp * Hp * 2 + seq * Hp * 4
    needed = 2 * bt * per_batch + 2 * resident + (4 << 20)
    vmem_limit = int(min(vmem_phys * 3 // 4, max(needed, 32 << 20)))

    cost = pl.CostEstimate(
        flops=2 * B * seq_pad * Kp * Hp,
        transcendentals=0,
        bytes_accessed=(B * seq_pad * Kp * 2          # patches (bf16)
                        + Kp * Hp * 2                 # weight (bf16)
                        + seq * Hp * 4                # add const (f32)
                        + B * seq * Hp * out_itemsize),
    )

    out = pl.pallas_call(
        embeddings_kernel,
        out_shape=jax.ShapeDtypeStruct((B, seq, Hp), out_dtype),
        grid_spec=grid_spec,
        compiler_params=pltpu.CompilerParams(
            dimension_semantics=("parallel",),
            vmem_limit_bytes=vmem_limit,
            # let XLA fuse the patchify transpose/pad/cast into operand 0
            allow_input_fusion=[True, False, False],
        ),
        cost_estimate=cost,
    )(patches, w_mat, add_const)

    return out[..., :hidden] if Hp != hidden else out


# ----------------------------------------------------------------------------- test
if __name__ == "__main__":
    # Small config consistent with the module
    config = dict(image_size=16, patch_size=4, num_channels=4,
                  hidden_size=32, hidden_dropout_prob=0.0)
    B = 2
    C = config["num_channels"]
    S = config["image_size"]
    P = config["patch_size"]
    hidden = config["hidden_size"]
    num_patches = (S // P) ** 2
    K = C * P * P

    key = jax.random.PRNGKey(0)
    k_x, k_w, k_b, k_cls, k_pos = jax.random.split(key, 5)

    x = jax.random.normal(k_x, (B, C, S, S), dtype=jnp.float32)
    conv_w = jax.random.normal(k_w, (hidden, C, P, P), dtype=jnp.float32) * 0.02
    conv_b = jax.random.normal(k_b, (hidden,), dtype=jnp.float32) * 0.02
    cls_token = jax.random.normal(k_cls, (1, 1, hidden), dtype=jnp.float32)
    pos_emb = jax.random.normal(k_pos, (1, num_patches + 1, hidden), dtype=jnp.float32)

    out = vit_embeddings(x, conv_w, conv_b, cls_token, pos_emb)
    out = jax.block_until_ready(out)

    # pure-JAX reference (same math as the torch eval-mode forward; matmul inputs
    # cast to bf16 to mirror the kernel's MXU precision, f32 accumulation)
    patches_r = x.reshape(B, C, S // P, P, S // P, P).transpose(0, 2, 4, 1, 3, 5)
    patches_r = patches_r.reshape(B, num_patches, K).astype(jnp.bfloat16)
    w_r = conv_w.reshape(hidden, K).T.astype(jnp.bfloat16)
    proj_ref = jnp.dot(patches_r, w_r, preferred_element_type=jnp.float32) + conv_b
    ref = jnp.concatenate(
        [jnp.broadcast_to(cls_token, (B, 1, hidden)), proj_ref], axis=1) + pos_emb

    assert out.shape == (B, num_patches + 1, hidden)
    assert out.dtype == jnp.float32
    max_err = float(jnp.max(jnp.abs(out - ref)))
    assert jnp.allclose(out, ref, atol=1e-2, rtol=1e-2), max_err
    print("KERNEL_OK")
</pallas_src>

<mosaic_0001>
module attributes {stable_mosaic.version = 11 : i64} {
  func.func @embeddings_kernel(%arg0: i32, %arg1: memref<64x128xbf16, #tpu.memory_space<vmem>>, %arg2: memref<128x128xbf16, #tpu.memory_space<vmem>>, %arg3: memref<17x128xf32, #tpu.memory_space<vmem>>, %arg4: memref<2x17x128xf32, #tpu.memory_space<vmem>>) attributes {dimension_semantics = [#tpu.dimension_semantics<parallel>], iteration_bounds = array<i64: 1>, scalar_prefetch = 0 : i64, scratch_operands = 0 : i64, tpu.core_type = #tpu.core_type<tc>, window_params = [{transform_indices = @transform_0, window_bounds = array<i64: 64, 128>}, {pipeline_mode = #tpu.pipeline_mode<synchronous>, transform_indices = @transform_1, window_bounds = array<i64: 128, 128>}, {pipeline_mode = #tpu.pipeline_mode<synchronous>, transform_indices = @transform_2, window_bounds = array<i64: 17, 128>}, {transform_indices = @transform_3, window_bounds = array<i64: 2, 17, 128>}]} {
    %c0 = arith.constant 0 : index
    %c0_0 = arith.constant 0 : index
    %0 = vector.load %arg1[%c0, %c0_0] : memref<64x128xbf16, #tpu.memory_space<vmem>>, vector<64x128xbf16>
    %c0_1 = arith.constant 0 : index
    %c0_2 = arith.constant 0 : index
    %1 = vector.load %arg2[%c0_1, %c0_2] : memref<128x128xbf16, #tpu.memory_space<vmem>>, vector<128x128xbf16>
    %cst = arith.constant dense<0.000000e+00> : vector<64x128xf32>
    %2 = tpu.matmul %0, %1, %cst {dimension_numbers = #tpu.dot_dimension_numbers<[1], [0], [0], [1], [0, 0, 1, 1], [], []>} : vector<64x128xbf16>, vector<128x128xbf16>, vector<64x128xf32> -> vector<64x128xf32>
    %3 = vector.shape_cast %2 : vector<64x128xf32> to vector<2x32x128xf32>
    %4 = vector.extract_strided_slice %3 {offsets = [0, 0, 0], sizes = [2, 17, 128], strides = [1, 1, 1]} : vector<2x32x128xf32> to vector<2x17x128xf32>
    %c0_3 = arith.constant 0 : index
    %c0_4 = arith.constant 0 : index
    %5 = vector.load %arg3[%c0_3, %c0_4] : memref<17x128xf32, #tpu.memory_space<vmem>>, vector<17x128xf32>
    %6 = vector.shape_cast %5 : vector<17x128xf32> to vector<1x17x128xf32>
    %7 = vector.broadcast %6 : vector<1x17x128xf32> to vector<2x17x128xf32>
    %8 = arith.addf %4, %7 : vector<2x17x128xf32>
    %c0_5 = arith.constant 0 : index
    %c0_6 = arith.constant 0 : index
    %c0_7 = arith.constant 0 : index
    %9 = vector.load %arg4[%c0_5, %c0_6, %c0_7] : memref<2x17x128xf32, #tpu.memory_space<vmem>>, vector<2x17x128xf32>
    tpu.vector_store %arg4[%c0_5, %c0_6, %c0_7], %8 {strides = array<i32>} : memref<2x17x128xf32, #tpu.memory_space<vmem>>, vector<2x17x128xf32>,
    return
  }
  func.func @transform_0(%arg0: i32) -> (i32, i32) {
    %c0_i32 = arith.constant 0 : i32
    %c0_i32_0 = arith.constant 0 : i32
    return %arg0, %c0_i32 : i32, i32
  }
  func.func @transform_1(%arg0: i32) -> (i32, i32) {
    %c0_i32 = arith.constant 0 : i32
    %c0_i32_0 = arith.constant 0 : i32
    %c0_i32_1 = arith.constant 0 : i32
    return %c0_i32, %c0_i32_0 : i32, i32
  }
  func.func @transform_2(%arg0: i32) -> (i32, i32) {
    %c0_i32 = arith.constant 0 : i32
    %c0_i32_0 = arith.constant 0 : i32
    %c0_i32_1 = arith.constant 0 : i32
    return %c0_i32, %c0_i32_0 : i32, i32
  }
  func.func @transform_3(%arg0: i32) -> (i32, i32, i32) {
    %c0_i32 = arith.constant 0 : i32
    %c0_i32_0 = arith.constant 0 : i32
    %c0_i32_1 = arith.constant 0 : i32
    return %arg0, %c0_i32, %c0_i32_0 : i32, i32, i32
  }
}

</mosaic_0001>

<llo_original>
// kernel: tpu_custom_call.1
$region0: #{tpu_custom_call.1}
  #allocation0 [shape = 'u32[]', space=smem, size = 0x4, offset = 0x4, fixed_abs, tag = 'smem constant byte address 0x4 - core index']
  #allocation1 [shape = 'u32[144,128]{1,0:T(1,128)}', space=vmem, size = 0x12000, scoped, tag = 'internal scratch']
  %s0 = inlined_call_operand.hbm [shape: bf16[64,128], index: 0, kind: input, shape index: {}]
  %s1 = inlined_call_operand.hbm [shape: bf16[128,128], index: 1, kind: input, shape index: {}]
  %s2 = inlined_call_operand.hbm [shape: f32[17,128], index: 2, kind: input, shape index: {}]
  %s3 = inlined_call_operand.vmem [shape: f32[2,17,128], index: 3, kind: output, shape index: {}]
  %s4 = sld [smem:[#allocation0]]
  $region34: #{tpu_custom_call.1} parent=0
    _
  %s6 = ssub.s32 1, %s4
  %s7 = scalar_select 0, %s6, %s4
  $region1: #{tpu_custom_call.1} parent=0
    #allocation2 [shape = 'u8[16384]{0}', space=vmem, size = 0x4000, scoped, tag = 'input window, operand 0, single buffered']
    #allocation3 [shape = 's32[1]{0}', space=sflag, size = 0x4, scoped, tag = 'scoped memory for tpu_custom_call.1']
    #allocation4 [shape = 'u8[32768]{0}', space=vmem, size = 0x8000, scoped, tag = 'input window, operand 1, single buffered']
    #allocation5 [shape = 's32[1]{0}', space=sflag, size = 0x4, scoped, tag = 'scoped memory for tpu_custom_call.1']
    #allocation6 [shape = 'u8[12288]{0}', space=vmem, size = 0x3000, scoped, tag = 'input window, operand 2, single buffered']
    %8 = vsyncpa [#allocation3], 0
    %9 = vsyncpa [#allocation5], 0
    // Predicated region
    $region2: #{tpu_custom_call.1} parent=1 // pred_check
      _
    $region3: #{tpu_custom_call.1} parent=1 // pred_check_branch
      %11 = sbr.rel (0) target = $region5
    $region4: #{tpu_custom_call.1} parent=1 // pred_region
      %s13 = ssub.s32 512, 512
      %14 = vsyncadd [#allocation3], %s13
      %s15 = sshll.u32 [#allocation2], 4
      %s16 = int_to_ptr.vmem [resolvable:$true] %s15
      %21 = dma.hbm_to_vmem [thread:$0]  %s0, 512, %s16, [#allocation3], 64, 64, 4
    $region5: #{tpu_custom_call.1} parent=1 // pred_fallthru
      _
    // Predicated region
    $region6: #{tpu_custom_call.1} parent=1 // pred_check
      _
    $region7: #{tpu_custom_call.1} parent=1 // pred_check_branch
      %23 = sbr.rel (0) target = $region9
    $region8: #{tpu_custom_call.1} parent=1 // pred_region
      %s25 = ssub.s32 1024, 1024
      %26 = vsyncadd [#allocation5], %s25
      %s27 = sshll.u32 [#allocation4], 4
      %s28 = int_to_ptr.vmem [resolvable:$true] %s27
      %33 = dma.hbm_to_vmem [thread:$0]  %s1, 1024, %s28, [#allocation5], 64, 64, 4
    $region9: #{tpu_custom_call.1} parent=1 // pred_fallthru
      _
    // Predicated region
    $region10: #{tpu_custom_call.1} parent=1 // pred_check
      _
    $region11: #{tpu_custom_call.1} parent=1 // pred_check_branch
      %35 = sbr.rel (0) target = $region13
    $region12: #{tpu_custom_call.1} parent=1 // pred_region
      %s37 = ssub.s32 384, 384
      %38 = vsyncadd [#allocation5], %s37
      %s39 = sshll.u32 [#allocation6], 4
      %s40 = int_to_ptr.vmem [resolvable:$true] %s39
      %45 = dma.hbm_to_vmem [thread:$0]  %s2, 384, %s40, [#allocation5], 128, 128, 8
    $region13: #{tpu_custom_call.1} parent=1 // pred_fallthru
      _
    // Predicated region
    $region14: #{tpu_custom_call.1} parent=1 // pred_check
      _
    $region15: #{tpu_custom_call.1} parent=1 // pred_check_branch
      %47 = sbr.rel (0) target = $region17
    $region16: #{tpu_custom_call.1} parent=1 // pred_region
      %48 = dma.done [#allocation3], 512
    $region17: #{tpu_custom_call.1} parent=1 // pred_fallthru
      _
    // Predicated region
    $region18: #{tpu_custom_call.1} parent=1 // pred_check
      _
    $region19: #{tpu_custom_call.1} parent=1 // pred_check_branch
      %50 = sbr.rel (0) target = $region21
    $region20: #{tpu_custom_call.1} parent=1 // pred_region
      %51 = dma.done [#allocation5], 1024
    $region21: #{tpu_custom_call.1} parent=1 // pred_fallthru
      _
    // Predicated region
    $region22: #{tpu_custom_call.1} parent=1 // pred_check
      _
    $region23: #{tpu_custom_call.1} parent=1 // pred_check_branch
      %53 = sbr.rel (0) target = $region25
    $region24: #{tpu_custom_call.1} parent=1 // pred_region
      %54 = dma.done [#allocation5], 384
    $region25: #{tpu_custom_call.1} parent=1 // pred_fallthru
      _
    %v56 = vld [vmem:[#allocation2] sm:$0xf]
    %v57 = vld [vmem:[#allocation2 + $0x4] sm:$0xf]
    %v58 = vld [vmem:[#allocation2 + $0x8] sm:$0xf]
    %v59 = vld [vmem:[#allocation2 + $0xc] sm:$0xf]
    %v60 = vld [vmem:[#allocation2 + $0x10] sm:$0xf]
    %v61 = vld [vmem:[#allocation2 + $0x14] sm:$0xf]
    %v62 = vld [vmem:[#allocation2 + $0x18] sm:$0xf]
    %v63 = vld [vmem:[#allocation2 + $0x1c] sm:$0xf]
    %v64 = vld [vmem:[#allocation4] sm:$0xf]
    %v65 = vld [vmem:[#allocation4 + $0x4] sm:$0xf]
    %v66 = vld [vmem:[#allocation4 + $0x8] sm:$0xf]
    %v67 = vld [vmem:[#allocation4 + $0xc] sm:$0xf]
    %v68 = vld [vmem:[#allocation4 + $0x10] sm:$0xf]
    %v69 = vld [vmem:[#allocation4 + $0x14] sm:$0xf]
    %v70 = vld [vmem:[#allocation4 + $0x18] sm:$0xf]
    %v71 = vld [vmem:[#allocation4 + $0x1c] sm:$0xf]
    %v72 = vld [vmem:[#allocation4 + $0x20] sm:$0xf]
    %v73 = vld [vmem:[#allocation4 + $0x24] sm:$0xf]
    %v74 = vld [vmem:[#allocation4 + $0x28] sm:$0xf]
    %v75 = vld [vmem:[#allocation4 + $0x2c] sm:$0xf]
    %v76 = vld [vmem:[#allocation4 + $0x30] sm:$0xf]
    %v77 = vld [vmem:[#allocation4 + $0x34] sm:$0xf]
    %v78 = vld [vmem:[#allocation4 + $0x38] sm:$0xf]
    %v79 = vld [vmem:[#allocation4 + $0x3c] sm:$0xf]
    %v88 = vunpack.c.l.b16 %v56
    %v89 = vunpack.c.l.b16 %v57
    %v90 = vunpack.c.l.b16 %v58
    %v91 = vunpack.c.l.b16 %v59
    %v92 = vunpack.c.l.b16 %v60
    %v93 = vunpack.c.l.b16 %v61
    %v94 = vunpack.c.l.b16 %v62
    %v95 = vunpack.c.l.b16 %v63
    %v96 = vpack.c.b16 %v89, %v88
    %v97 = vpack.c.b16 %v91, %v90
    %v98 = vpack.c.b16 %v93, %v92
    %v99 = vpack.c.b16 %v95, %v94
    %v120 = vunpack.c.l.b16 %v64
    %v121 = vunpack.c.l.b16 %v65
    %v122 = vunpack.c.l.b16 %v66
    %v123 = vunpack.c.l.b16 %v67
    %v124 = vunpack.c.l.b16 %v68
    %v125 = vunpack.c.l.b16 %v69
    %v126 = vunpack.c.l.b16 %v70
    %v127 = vunpack.c.l.b16 %v71
    %v128 = vunpack.c.l.b16 %v72
    %v129 = vunpack.c.l.b16 %v73
    %v130 = vunpack.c.l.b16 %v74
    %v131 = vunpack.c.l.b16 %v75
    %v132 = vunpack.c.l.b16 %v76
    %v133 = vunpack.c.l.b16 %v77
    %v134 = vunpack.c.l.b16 %v78
    %v135 = vunpack.c.l.b16 %v79
    %v136 = vpack.c.b16 %v121, %v120
    %v137 = vpack.c.b16 %v123, %v122
    %v138 = vpack.c.b16 %v125, %v124
    %v139 = vpack.c.b16 %v127, %v126
    %v140 = vpack.c.b16 %v129, %v128
    %v141 = vpack.c.b16 %v131, %v130
    %v142 = vpack.c.b16 %v133, %v132
    %v143 = vpack.c.b16 %v135, %v134
    %152 = vmatprep.subr.bf16.mxu0 0
    %153 = vmatpush1.bf16.msra.mxu0 %v136
    %154 = vmatprep.subr.bf16.mxu0 0
    %155 = vmatpush1.bf16.msra.mxu0 %v137
    %156 = vmatprep.subr.bf16.mxu0 0
    %157 = vmatpush1.bf16.msra.mxu0 %v138
    %158 = vmatprep.subr.bf16.mxu0 0
    %159 = vmatpush1.bf16.msra.mxu0 %v139
    %160 = vmatprep.subr.bf16.mxu0 0
    %161 = vmatpush1.bf16.msra.mxu0 %v140
    %162 = vmatprep.subr.bf16.mxu0 0
    %163 = vmatpush1.bf16.msra.mxu0 %v141
    %164 = vmatprep.subr.bf16.mxu0 0
    %165 = vmatpush1.bf16.msra.mxu0 %v142
    %166 = vmatprep.subr.bf16.mxu0 0
    %167 = vmatpush1.bf16.msra.mxu0 %v143
    %168 = vmatprep.subr.bf16.mxu0 0
    %169 = vmatpush1.bf16.msra.mxu0 0
    %170 = vmatprep.subr.bf16.mxu0 0
    %171 = vmatpush1.bf16.msra.mxu0 0
    %172 = vmatprep.subr.bf16.mxu0 0
    %173 = vmatpush1.bf16.msra.mxu0 0
    %174 = vmatprep.subr.bf16.mxu0 0
    %175 = vmatpush1.bf16.msra.mxu0 0
    %176 = vmatprep.subr.bf16.mxu0 0
    %177 = vmatpush1.bf16.msra.mxu0 0
    %178 = vmatprep.subr.bf16.mxu0 0
    %179 = vmatpush1.bf16.msra.mxu0 0
    %180 = vmatprep.subr.bf16.mxu0 0
    %181 = vmatpush1.bf16.msra.mxu0 0
    %182 = vmatprep.subr.bf16.mxu0 0
    %183 = vmatpush1.bf16.msra.mxu0 0
    %184 = vmatprep.mubr.bf16.mxu0 0
    %185 = vmatmul.mubr.bf16.gmra.mrb[0].mxu0 %v96
    %v186 = vpop.f32.mrb[0].mxu0
    %v187 = vadd.f32 0.0, %v186
    %v188 = vpop.f32.mrb[0].mxu0
    %v189 = vpop.f32.mrb[0].mxu0
    %v190 = vadd.f32 0.0, %v189
    %v191 = vpop.f32.mrb[0].mxu0
    %192 = vmatprep.mubr.bf16.mxu0 0
    %193 = vmatmul.mubr.bf16.gmra.mrb[0].mxu0 %v97
    %v194 = vpop.f32.mrb[0].mxu0
    %v195 = vadd.f32 0.0, %v194
    %v196 = vpop.f32.mrb[0].mxu0
    %v197 = vpop.f32.mrb[0].mxu0
    %v198 = vpop.f32.mrb[0].mxu0
    %199 = vmatprep.mubr.bf16.mxu0 0
    %200 = vmatmul.mubr.bf16.gmra.mrb[0].mxu0 %v98
    %v201 = vpop.f32.mrb[0].mxu0
    %v202 = vadd.f32 0.0, %v201
    %v203 = vpop.f32.mrb[0].mxu0
    %v204 = vpop.f32.mrb[0].mxu0
    %v205 = vadd.f32 0.0, %v204
    %v206 = vpop.f32.mrb[0].mxu0
    %207 = vmatprep.mubr.bf16.mxu0 0
    %208 = vmatmul.mubr.bf16.gmra.mrb[0].mxu0 %v99
    %v209 = vpop.f32.mrb[0].mxu0
    %v210 = vadd.f32 0.0, %v209
    %v211 = vpop.f32.mrb[0].mxu0
    %v212 = vpop.f32.mrb[0].mxu0
    %v213 = vpop.f32.mrb[0].mxu0
    %214 = vdwg.mxu0
    %v215 = vld [vmem:[#allocation6] sm:$0xff]
    %v216 = vld [vmem:[#allocation6 + $0x8] sm:$0xff]
    %v217 = vld [vmem:[#allocation6 + $0x10] sm:$0x1]
    %v218 = vadd.f32 %v187, %v215
    %v219 = vadd.f32 %v190, %v216
    %v220 = vadd.f32 %v195, %v217
    %v221 = vadd.f32 %v202, %v215
    %v222 = vadd.f32 %v205, %v216
    %v223 = vadd.f32 %v210, %v217
    %224 = vst [vmem:[%s3] sm:$0xff] %v218
    %225 = vst [vmem:[%s3 + $0x8] sm:$0xff] %v219
    %226 = vst [vmem:[%s3 + $0x10] sm:$0x1] %v220
    %227 = vst [vmem:[%s3 + $0x18] sm:$0xff] %v221
    %228 = vst [vmem:[%s3 + $0x20] sm:$0xff] %v222
    %229 = vst [vmem:[%s3 + $0x28] sm:$0x1] %v223
    // Predicated region
    $region26: #{tpu_custom_call.1} parent=1 // pred_check
      _
    $region27: #{tpu_custom_call.1} parent=1 // pred_check_branch
      %231 = sbr.rel (0) target = $region29
    $region28: #{tpu_custom_call.1} parent=1 // pred_region
      _
    $region29: #{tpu_custom_call.1} parent=1 // pred_fallthru
      _
    // Predicated region
    $region30: #{tpu_custom_call.1} parent=1 // pred_check
      _
    $region31: #{tpu_custom_call.1} parent=1 // pred_check_branch
      %233 = sbr.rel (0) target = $region33
    $region32: #{tpu_custom_call.1} parent=1 // pred_region
      _
    $region33: #{tpu_custom_call.1} parent=1 // pred_fallthru
      _
    %234 = vsyncpa [#allocation3], 1
    %235 = vsyncpa [#allocation5], 1

</llo_original>
